<compile_context>
chip_gen: v7x
topology: tpu7x:2x2x1
jax: 0.10.0
libtpu: 0.0.40
codegen_flags: <defaults>
</compile_context>

<pallas_src>
import functools

import jax
import jax.numpy as jnp
from jax.experimental import pallas as pl
from jax.experimental.pallas import tpu as pltpu

EPS = 1e-5
LANE = 128
SUBLANE = 8


def _round_up(x, m):
    return (x + m - 1) // m * m


# ---------------------------------------------------------------------------
# Kernels
# ---------------------------------------------------------------------------
def actor_kernel_bn(state_ref, w_ref, vec_ref, out_ref, *, dims, mm_dtype):
    """Whole-batch block: BN statistics need the full batch."""
    state_size, hpad, out_pad, action_size = dims
    b = state_ref.shape[0]
    inv_b = 1.0 / float(b)
    ones_row = jnp.ones((1, b), jnp.float32)  # hoisted constant

    def bn_train(x, gamma, beta):
        # Batch stats on the MXU (ones-row matmul); centered two-pass variance
        # in f32 to avoid catastrophic cancellation.
        mu = jnp.dot(ones_row, x, preferred_element_type=jnp.float32) * inv_b
        xc = x - mu
        var = jnp.dot(ones_row, xc * xc,
                      preferred_element_type=jnp.float32) * inv_b
        inv = jax.lax.rsqrt(var + EPS)
        return xc * (gamma * inv) + beta

    # Packed vector rows: [b3, g0, be0, g1, be1, g2, be2] (zero-padded lanes).
    b3 = vec_ref[0:1, :action_size]
    g0 = vec_ref[1:2, :state_size]
    be0 = vec_ref[2:3, :state_size]
    g1 = vec_ref[3:4, :hpad]
    be1 = vec_ref[4:5, :hpad]
    g2 = vec_ref[5:6, :hpad]
    be2 = vec_ref[6:7, :hpad]

    # Weight slab (pre-cast to mm_dtype on the host).
    w1 = w_ref[0, :state_size, :hpad]
    w2 = w_ref[1, :hpad, :hpad]
    w3 = w_ref[2, :hpad, :out_pad]

    x = bn_train(state_ref[...], g0, be0)
    # fc1/fc2 biases intentionally omitted — BN's mean subtraction cancels them.
    h1 = jnp.dot(x.astype(mm_dtype), w1, preferred_element_type=jnp.float32)
    h1 = jnp.maximum(bn_train(h1, g1, be1), 0.0)
    h2 = jnp.dot(h1.astype(mm_dtype), w2, preferred_element_type=jnp.float32)
    h2 = jnp.maximum(bn_train(h2, g2, be2), 0.0)
    z3 = jnp.dot(h2.astype(mm_dtype), w3, preferred_element_type=jnp.float32)
    # Only the real action lanes are stored (no padded output writeback).
    out_ref[...] = jnp.tanh(z3[:, :action_size] + b3)


def actor_kernel_nobn(state_ref, w_ref, vec_ref, out_ref, *, dims, mm_dtype):
    """Batch-tiled block: rows are independent, weights stay VMEM-resident."""
    state_size, hpad, out_pad, action_size = dims
    # Packed vector rows: [b1, b2, b3] (zero-padded lanes).
    b1 = vec_ref[0:1, :hpad]
    b2 = vec_ref[1:2, :hpad]
    b3 = vec_ref[2:3, :action_size]

    w1 = w_ref[0, :state_size, :hpad]
    w2 = w_ref[1, :hpad, :hpad]
    w3 = w_ref[2, :hpad, :out_pad]

    x = state_ref[...]
    h1 = jnp.maximum(
        jnp.dot(x.astype(mm_dtype), w1, preferred_element_type=jnp.float32)
        + b1, 0.0)
    h2 = jnp.maximum(
        jnp.dot(h1.astype(mm_dtype), w2, preferred_element_type=jnp.float32)
        + b2, 0.0)
    z3 = jnp.dot(h2.astype(mm_dtype), w3, preferred_element_type=jnp.float32)
    out_ref[...] = jnp.tanh(z3[:, :action_size] + b3)


# ---------------------------------------------------------------------------
# Host-side param packing (done ONCE, not per forward call)
# ---------------------------------------------------------------------------
def pack_actor_params(params, batchnorm=True, matmul_dtype=jnp.float32):
    state_size, fc1 = params["w1"].shape
    fc2, action_size = params["w3"].shape

    hpad = _round_up(max(fc1, fc2), LANE)          # hidden widths -> lane-dense
    out_pad = _round_up(action_size, LANE)         # MXU-only width for w3
    kpad = max(_round_up(state_size, SUBLANE), hpad)
    cpad = max(hpad, out_pad)
    lane_pad = _round_up(max(state_size, hpad, out_pad), LANE)

    def pad2(w):
        return jnp.pad(w.astype(jnp.float32),
                       ((0, kpad - w.shape[0]), (0, cpad - w.shape[1])))

    # Single weight slab, pre-cast to the matmul dtype (no in-kernel casts of
    # VMEM-resident weights; half the DMA bytes if matmul_dtype=bf16).
    wslab = jnp.stack([pad2(params["w1"]), pad2(params["w2"]),
                       pad2(params["w3"])], axis=0).astype(matmul_dtype)

    def row(v):
        v = jnp.ravel(v).astype(jnp.float32)
        return jnp.pad(v, (0, lane_pad - v.shape[0]))

    if batchnorm:
        rows = [row(params["b3"]),
                row(params["g0"]), row(params["be0"]),
                row(params["g1"]), row(params["be1"]),
                row(params["g2"]), row(params["be2"])]
    else:
        rows = [row(params["b1"]), row(params["b2"]), row(params["b3"])]
    vecs = jnp.stack(rows, axis=0)

    return dict(wslab=wslab, vecs=vecs,
                dims=(state_size, hpad, out_pad, action_size),
                batchnorm=batchnorm, matmul_dtype=matmul_dtype)


# ---------------------------------------------------------------------------
# Forward wrapper
# ---------------------------------------------------------------------------
def actor_forward(state, packed, *, batch_tile=1024):
    state_size, hpad, out_pad, action_size = packed["dims"]
    batch = state.shape[0]
    mm_dtype = packed["matmul_dtype"]
    wslab, vecs = packed["wslab"], packed["vecs"]
    nvec, lane_pad = vecs.shape

    vmem_cap = 48 << 20  # above 16/32 MiB defaults, headroom under v7x 64 MiB

    if packed["batchnorm"]:
        # BatchNorm needs full-batch statistics -> single VMEM-resident block.
        kernel = functools.partial(actor_kernel_bn, dims=packed["dims"],
                                   mm_dtype=mm_dtype)
        vmem = pl.BlockSpec(memory_space=pltpu.MemorySpace.VMEM)
        out = pl.pallas_call(
            kernel,
            out_shape=jax.ShapeDtypeStruct((batch, action_size), jnp.float32),
            in_specs=[vmem, vmem, vmem],
            out_specs=vmem,
            compiler_params=pltpu.CompilerParams(vmem_limit_bytes=vmem_cap),
        )(state, wslab, vecs)
    else:
        # Per-row independent -> tile the batch, keep weight slab VMEM-resident.
        tb = batch if batch <= batch_tile else batch_tile
        kernel = functools.partial(actor_kernel_nobn, dims=packed["dims"],
                                   mm_dtype=mm_dtype)
        out = pl.pallas_call(
            kernel,
            out_shape=jax.ShapeDtypeStruct((batch, action_size), jnp.float32),
            grid=(pl.cdiv(batch, tb),),
            in_specs=[
                pl.BlockSpec((tb, state_size), lambda i: (i, 0)),
                pl.BlockSpec(wslab.shape, lambda i: (0, 0, 0)),
                pl.BlockSpec((nvec, lane_pad), lambda i: (0, 0)),
            ],
            out_specs=pl.BlockSpec((tb, action_size), lambda i: (i, 0)),
            compiler_params=pltpu.CompilerParams(
                dimension_semantics=("parallel",),
                vmem_limit_bytes=vmem_cap),
        )(state, wslab, vecs)

    return out


# ---------------------------------------------------------------------------
# Init + plain-JAX reference (for correctness checking)
# ---------------------------------------------------------------------------
def init_actor_params(key, state_size, action_size, fc1, fc2):
    """Deterministic init mirroring the PyTorch module's reset_parameters
    ('uniform' branch). hidden_init uses weight.size()[0] == out_features,
    replicated faithfully. Weights stored as (in, out)."""
    ks = jax.random.split(key, 6)

    def uni(k, shape, lim):
        return jax.random.uniform(k, shape, jnp.float32, -lim, lim)

    lim1 = 1.0 / jnp.sqrt(float(fc1))
    lim2 = 1.0 / jnp.sqrt(float(fc2))
    w1 = uni(ks[0], (state_size, fc1), lim1)
    w2 = uni(ks[1], (fc1, fc2), lim2)
    w3 = uni(ks[2], (fc2, action_size), 3e-3)

    b1 = uni(ks[3], (1, fc1), 1.0 / jnp.sqrt(float(state_size)))
    b2 = uni(ks[4], (1, fc2), 1.0 / jnp.sqrt(float(fc1)))
    b3 = uni(ks[5], (1, action_size), 1.0 / jnp.sqrt(float(fc2)))

    return dict(
        w1=w1, b1=b1, w2=w2, b2=b2, w3=w3, b3=b3,
        g0=jnp.ones((1, state_size), jnp.float32),
        be0=jnp.zeros((1, state_size), jnp.float32),
        g1=jnp.ones((1, fc1), jnp.float32),
        be1=jnp.zeros((1, fc1), jnp.float32),
        g2=jnp.ones((1, fc2), jnp.float32),
        be2=jnp.zeros((1, fc2), jnp.float32),
    )


def _bn_ref(x, gamma, beta):
    mu = jnp.mean(x, axis=0, keepdims=True)
    var = jnp.mean((x - mu) ** 2, axis=0, keepdims=True)
    return (x - mu) * jax.lax.rsqrt(var + EPS) * gamma + beta


def actor_reference(state, p, batchnorm=True):
    if batchnorm:
        x = _bn_ref(state, p["g0"], p["be0"])
        h1 = jnp.maximum(_bn_ref(x @ p["w1"] + p["b1"], p["g1"], p["be1"]), 0.0)
        h2 = jnp.maximum(_bn_ref(h1 @ p["w2"] + p["b2"], p["g2"], p["be2"]), 0.0)
    else:
        h1 = jnp.maximum(state @ p["w1"] + p["b1"], 0.0)
        h2 = jnp.maximum(h1 @ p["w2"] + p["b2"], 0.0)
    return jnp.tanh(h2 @ p["w3"] + p["b3"])


if __name__ == "__main__":
    batch = 8
    state_size = 16
    action_size = 4
    fc1_units, fc2_units = 64, 32

    key = jax.random.PRNGKey(0)
    k_state, k_params = jax.random.split(key)

    state = jax.random.normal(k_state, (batch, state_size), jnp.float32)
    params = init_actor_params(k_params, state_size, action_size,
                               fc1_units, fc2_units)

    # Pack parameters once (host side) for each path.
    packed_bn = pack_actor_params(params, batchnorm=True)
    packed_nobn = pack_actor_params(params, batchnorm=False)

    # batchnorm=True path (training-mode batch statistics)
    out_bn = jax.block_until_ready(actor_forward(state, packed_bn))
    ref_bn = actor_reference(state, params, batchnorm=True)

    # batchnorm=False path (batch-gridded, parallel)
    out_nobn = jax.block_until_ready(actor_forward(state, packed_nobn))
    ref_nobn = actor_reference(state, params, batchnorm=False)

    assert out_bn.shape == (batch, action_size)
    assert out_nobn.shape == (batch, action_size)
    assert jnp.allclose(out_bn, ref_bn, atol=1e-4, rtol=1e-4)
    assert jnp.allclose(out_nobn, ref_nobn, atol=1e-4, rtol=1e-4)

    print("KERNEL_OK")
</pallas_src>

<mosaic_0001>
module attributes {stable_mosaic.version = 11 : i64} {
  func.func @actor_kernel_bn(%arg0: memref<8x16xf32, #tpu.memory_space<vmem>>, %arg1: memref<3x128x128xf32, #tpu.memory_space<vmem>>, %arg2: memref<7x128xf32, #tpu.memory_space<vmem>>, %arg3: memref<8x4xf32, #tpu.memory_space<vmem>>) attributes {dimension_semantics = [], scalar_prefetch = 0 : i64, scratch_operands = 0 : i64, tpu.core_type = #tpu.core_type<tc>} {
    %cst = arith.constant 1.000000e+00 : f32
    %0 = vector.broadcast %cst : f32 to vector<1x8xf32>
    %c0 = arith.constant 0 : index
    %c0_0 = arith.constant 0 : index
    %1 = vector.load %arg2[%c0, %c0_0] : memref<7x128xf32, #tpu.memory_space<vmem>>, vector<1x4xf32>
    %c1 = arith.constant 1 : index
    %c0_1 = arith.constant 0 : index
    %2 = vector.load %arg2[%c1, %c0_1] : memref<7x128xf32, #tpu.memory_space<vmem>>, vector<1x16xf32>
    %c2 = arith.constant 2 : index
    %c0_2 = arith.constant 0 : index
    %3 = vector.load %arg2[%c2, %c0_2] : memref<7x128xf32, #tpu.memory_space<vmem>>, vector<1x16xf32>
    %c3 = arith.constant 3 : index
    %c0_3 = arith.constant 0 : index
    %4 = vector.load %arg2[%c3, %c0_3] : memref<7x128xf32, #tpu.memory_space<vmem>>, vector<1x128xf32>
    %c4 = arith.constant 4 : index
    %c0_4 = arith.constant 0 : index
    %5 = vector.load %arg2[%c4, %c0_4] : memref<7x128xf32, #tpu.memory_space<vmem>>, vector<1x128xf32>
    %c5 = arith.constant 5 : index
    %c0_5 = arith.constant 0 : index
    %6 = vector.load %arg2[%c5, %c0_5] : memref<7x128xf32, #tpu.memory_space<vmem>>, vector<1x128xf32>
    %c6 = arith.constant 6 : index
    %c0_6 = arith.constant 0 : index
    %7 = vector.load %arg2[%c6, %c0_6] : memref<7x128xf32, #tpu.memory_space<vmem>>, vector<1x128xf32>
    %c0_7 = arith.constant 0 : index
    %c0_8 = arith.constant 0 : index
    %c0_9 = arith.constant 0 : index
    %8 = vector.load %arg1[%c0_7, %c0_8, %c0_9] : memref<3x128x128xf32, #tpu.memory_space<vmem>>, vector<1x16x128xf32>
    %9 = vector.shape_cast %8 : vector<1x16x128xf32> to vector<16x128xf32>
    %c1_10 = arith.constant 1 : index
    %c0_11 = arith.constant 0 : index
    %c0_12 = arith.constant 0 : index
    %10 = vector.load %arg1[%c1_10, %c0_11, %c0_12] : memref<3x128x128xf32, #tpu.memory_space<vmem>>, vector<1x128x128xf32>
    %11 = vector.shape_cast %10 : vector<1x128x128xf32> to vector<128x128xf32>
    %c2_13 = arith.constant 2 : index
    %c0_14 = arith.constant 0 : index
    %c0_15 = arith.constant 0 : index
    %12 = vector.load %arg1[%c2_13, %c0_14, %c0_15] : memref<3x128x128xf32, #tpu.memory_space<vmem>>, vector<1x128x128xf32>
    %13 = vector.shape_cast %12 : vector<1x128x128xf32> to vector<128x128xf32>
    %c0_16 = arith.constant 0 : index
    %c0_17 = arith.constant 0 : index
    %14 = vector.load %arg0[%c0_16, %c0_17] : memref<8x16xf32, #tpu.memory_space<vmem>>, vector<8x16xf32>
    %cst_18 = arith.constant dense<0.000000e+00> : vector<1x16xf32>
    %15 = tpu.matmul %0, %14, %cst_18 {dimension_numbers = #tpu.dot_dimension_numbers<[1], [0], [0], [1], [0, 0, 1, 1], [], []>} : vector<1x8xf32>, vector<8x16xf32>, vector<1x16xf32> -> vector<1x16xf32>
    %cst_19 = arith.constant 1.250000e-01 : f32
    %16 = vector.broadcast %cst_19 : f32 to vector<1x16xf32>
    %17 = arith.mulf %15, %16 : vector<1x16xf32>
    %18 = vector.broadcast %17 : vector<1x16xf32> to vector<8x16xf32>
    %19 = arith.subf %14, %18 : vector<8x16xf32>
    %20 = arith.mulf %19, %19 : vector<8x16xf32>
    %cst_20 = arith.constant dense<0.000000e+00> : vector<1x16xf32>
    %21 = tpu.matmul %0, %20, %cst_20 {dimension_numbers = #tpu.dot_dimension_numbers<[1], [0], [0], [1], [0, 0, 1, 1], [], []>} : vector<1x8xf32>, vector<8x16xf32>, vector<1x16xf32> -> vector<1x16xf32>
    %cst_21 = arith.constant 1.250000e-01 : f32
    %22 = vector.broadcast %cst_21 : f32 to vector<1x16xf32>
    %23 = arith.mulf %21, %22 : vector<1x16xf32>
    %cst_22 = arith.constant 9.99999974E-6 : f32
    %24 = vector.broadcast %cst_22 : f32 to vector<1x16xf32>
    %25 = arith.addf %23, %24 : vector<1x16xf32>
    %26 = math.rsqrt %25 : vector<1x16xf32>
    %27 = arith.mulf %2, %26 : vector<1x16xf32>
    %28 = vector.broadcast %27 : vector<1x16xf32> to vector<8x16xf32>
    %29 = arith.mulf %19, %28 : vector<8x16xf32>
    %30 = vector.broadcast %3 : vector<1x16xf32> to vector<8x16xf32>
    %31 = arith.addf %29, %30 : vector<8x16xf32>
    %cst_23 = arith.constant dense<0.000000e+00> : vector<8x128xf32>
    %32 = tpu.matmul %31, %9, %cst_23 {dimension_numbers = #tpu.dot_dimension_numbers<[1], [0], [0], [1], [0, 0, 1, 1], [], []>} : vector<8x16xf32>, vector<16x128xf32>, vector<8x128xf32> -> vector<8x128xf32>
    %cst_24 = arith.constant dense<0.000000e+00> : vector<1x128xf32>
    %33 = tpu.matmul %0, %32, %cst_24 {dimension_numbers = #tpu.dot_dimension_numbers<[1], [0], [0], [1], [0, 0, 1, 1], [], []>} : vector<1x8xf32>, vector<8x128xf32>, vector<1x128xf32> -> vector<1x128xf32>
    %cst_25 = arith.constant 1.250000e-01 : f32
    %34 = vector.broadcast %cst_25 : f32 to vector<1x128xf32>
    %35 = arith.mulf %33, %34 : vector<1x128xf32>
    %36 = vector.broadcast %35 : vector<1x128xf32> to vector<8x128xf32>
    %37 = arith.subf %32, %36 : vector<8x128xf32>
    %38 = arith.mulf %37, %37 : vector<8x128xf32>
    %cst_26 = arith.constant dense<0.000000e+00> : vector<1x128xf32>
    %39 = tpu.matmul %0, %38, %cst_26 {dimension_numbers = #tpu.dot_dimension_numbers<[1], [0], [0], [1], [0, 0, 1, 1], [], []>} : vector<1x8xf32>, vector<8x128xf32>, vector<1x128xf32> -> vector<1x128xf32>
    %cst_27 = arith.constant 1.250000e-01 : f32
    %40 = vector.broadcast %cst_27 : f32 to vector<1x128xf32>
    %41 = arith.mulf %39, %40 : vector<1x128xf32>
    %cst_28 = arith.constant 9.99999974E-6 : f32
    %42 = vector.broadcast %cst_28 : f32 to vector<1x128xf32>
    %43 = arith.addf %41, %42 : vector<1x128xf32>
    %44 = math.rsqrt %43 : vector<1x128xf32>
    %45 = arith.mulf %4, %44 : vector<1x128xf32>
    %46 = vector.broadcast %45 : vector<1x128xf32> to vector<8x128xf32>
    %47 = arith.mulf %37, %46 : vector<8x128xf32>
    %48 = vector.broadcast %5 : vector<1x128xf32> to vector<8x128xf32>
    %49 = arith.addf %47, %48 : vector<8x128xf32>
    %cst_29 = arith.constant 0.000000e+00 : f32
    %50 = vector.broadcast %cst_29 : f32 to vector<8x128xf32>
    %51 = arith.maximumf %49, %50 : vector<8x128xf32>
    %cst_30 = arith.constant dense<0.000000e+00> : vector<8x128xf32>
    %52 = tpu.matmul %51, %11, %cst_30 {dimension_numbers = #tpu.dot_dimension_numbers<[1], [0], [0], [1], [0, 0, 1, 1], [], []>} : vector<8x128xf32>, vector<128x128xf32>, vector<8x128xf32> -> vector<8x128xf32>
    %cst_31 = arith.constant dense<0.000000e+00> : vector<1x128xf32>
    %53 = tpu.matmul %0, %52, %cst_31 {dimension_numbers = #tpu.dot_dimension_numbers<[1], [0], [0], [1], [0, 0, 1, 1], [], []>} : vector<1x8xf32>, vector<8x128xf32>, vector<1x128xf32> -> vector<1x128xf32>
    %cst_32 = arith.constant 1.250000e-01 : f32
    %54 = vector.broadcast %cst_32 : f32 to vector<1x128xf32>
    %55 = arith.mulf %53, %54 : vector<1x128xf32>
    %56 = vector.broadcast %55 : vector<1x128xf32> to vector<8x128xf32>
    %57 = arith.subf %52, %56 : vector<8x128xf32>
    %58 = arith.mulf %57, %57 : vector<8x128xf32>
    %cst_33 = arith.constant dense<0.000000e+00> : vector<1x128xf32>
    %59 = tpu.matmul %0, %58, %cst_33 {dimension_numbers = #tpu.dot_dimension_numbers<[1], [0], [0], [1], [0, 0, 1, 1], [], []>} : vector<1x8xf32>, vector<8x128xf32>, vector<1x128xf32> -> vector<1x128xf32>
    %cst_34 = arith.constant 1.250000e-01 : f32
    %60 = vector.broadcast %cst_34 : f32 to vector<1x128xf32>
    %61 = arith.mulf %59, %60 : vector<1x128xf32>
    %cst_35 = arith.constant 9.99999974E-6 : f32
    %62 = vector.broadcast %cst_35 : f32 to vector<1x128xf32>
    %63 = arith.addf %61, %62 : vector<1x128xf32>
    %64 = math.rsqrt %63 : vector<1x128xf32>
    %65 = arith.mulf %6, %64 : vector<1x128xf32>
    %66 = vector.broadcast %65 : vector<1x128xf32> to vector<8x128xf32>
    %67 = arith.mulf %57, %66 : vector<8x128xf32>
    %68 = vector.broadcast %7 : vector<1x128xf32> to vector<8x128xf32>
    %69 = arith.addf %67, %68 : vector<8x128xf32>
    %cst_36 = arith.constant 0.000000e+00 : f32
    %70 = vector.broadcast %cst_36 : f32 to vector<8x128xf32>
    %71 = arith.maximumf %69, %70 : vector<8x128xf32>
    %cst_37 = arith.constant dense<0.000000e+00> : vector<8x128xf32>
    %72 = tpu.matmul %71, %13, %cst_37 {dimension_numbers = #tpu.dot_dimension_numbers<[1], [0], [0], [1], [0, 0, 1, 1], [], []>} : vector<8x128xf32>, vector<128x128xf32>, vector<8x128xf32> -> vector<8x128xf32>
    %73 = vector.extract_strided_slice %72 {offsets = [0, 0], sizes = [8, 4], strides = [1, 1]} : vector<8x128xf32> to vector<8x4xf32>
    %74 = vector.broadcast %1 : vector<1x4xf32> to vector<8x4xf32>
    %75 = arith.addf %73, %74 : vector<8x4xf32>
    %76 = math.tanh %75 : vector<8x4xf32>
    %c0_38 = arith.constant 0 : index
    %c0_39 = arith.constant 0 : index
    %77 = vector.load %arg3[%c0_38, %c0_39] : memref<8x4xf32, #tpu.memory_space<vmem>>, vector<8x4xf32>
    tpu.vector_store %arg3[%c0_38, %c0_39], %76 {strides = array<i32>} : memref<8x4xf32, #tpu.memory_space<vmem>>, vector<8x4xf32>,
    return
  }
}

</mosaic_0001>

<llo_original>
// kernel: tpu_custom_call.1
$region0: #{tpu_custom_call.1}
  #allocation0 [shape = 'u32[]', space=smem, size = 0x4, offset = 0x4, fixed_abs, tag = 'smem constant byte address 0x4 - core index']
  #allocation1 [shape = 'u32[144,128]{1,0:T(1,128)}', space=vmem, size = 0x12000, scoped, tag = 'internal scratch']
  %s0 = inlined_call_operand.hbm [shape: f32[8,16], index: 0, kind: input, shape index: {}]
  %s1 = inlined_call_operand.hbm [shape: f32[3,128,128], index: 1, kind: input, shape index: {}]
  %s2 = inlined_call_operand.hbm [shape: f32[7,128], index: 2, kind: input, shape index: {}]
  %s3 = inlined_call_operand.vmem [shape: f32[8,4], index: 3, kind: output, shape index: {}]
  %s4 = sld [smem:[#allocation0]]
  $region34: #{tpu_custom_call.1} parent=0
    _
  %s6 = ssub.s32 1, %s4
  %s7 = scalar_select 0, %s6, %s4
  $region1: #{tpu_custom_call.1} parent=0
    #allocation2 [shape = 'u8[4096]{0}', space=vmem, size = 0x1000, scoped, tag = 'input window, operand 0, single buffered']
    #allocation3 [shape = 's32[1]{0}', space=sflag, size = 0x4, scoped, tag = 'scoped memory for tpu_custom_call.1']
    #allocation4 [shape = 'u8[196608]{0}', space=vmem, size = 0x30000, scoped, tag = 'input window, operand 1, single buffered']
    #allocation5 [shape = 's32[1]{0}', space=sflag, size = 0x4, scoped, tag = 'scoped memory for tpu_custom_call.1']
    #allocation6 [shape = 'u8[4096]{0}', space=vmem, size = 0x1000, scoped, tag = 'input window, operand 2, single buffered']
    %8 = vsyncpa [#allocation3], 0
    %9 = vsyncpa [#allocation5], 0
    // Predicated region
    $region2: #{tpu_custom_call.1} parent=1 // pred_check
      _
    $region3: #{tpu_custom_call.1} parent=1 // pred_check_branch
      %11 = sbr.rel (0) target = $region5
    $region4: #{tpu_custom_call.1} parent=1 // pred_region
      %s13 = ssub.s32 128, 128
      %14 = vsyncadd [#allocation3], %s13
      %s16 = sshll.u32 [#allocation2], 4
      %s17 = int_to_ptr.vmem [resolvable:$true] %s16
      %19 = dma.hbm_to_vmem [thread:$0]  %s0, 128, %s17, [#allocation3]
    $region5: #{tpu_custom_call.1} parent=1 // pred_fallthru
      _
    // Predicated region
    $region6: #{tpu_custom_call.1} parent=1 // pred_check
      _
    $region7: #{tpu_custom_call.1} parent=1 // pred_check_branch
      %21 = sbr.rel (0) target = $region9
    $region8: #{tpu_custom_call.1} parent=1 // pred_region
      %s23 = ssub.s32 6144, 6144
      %24 = vsyncadd [#allocation5], %s23
      %s25 = sshll.u32 [#allocation4], 4
      %s26 = int_to_ptr.vmem [resolvable:$true] %s25
      %31 = dma.hbm_to_vmem [thread:$0]  %s1, 6144, %s26, [#allocation5], 128, 128, 8
    $region9: #{tpu_custom_call.1} parent=1 // pred_fallthru
      _
    // Predicated region
    $region10: #{tpu_custom_call.1} parent=1 // pred_check
      _
    $region11: #{tpu_custom_call.1} parent=1 // pred_check_branch
      %33 = sbr.rel (0) target = $region13
    $region12: #{tpu_custom_call.1} parent=1 // pred_region
      %s35 = ssub.s32 128, 128
      %36 = vsyncadd [#allocation5], %s35
      %s38 = sshll.u32 [#allocation6], 4
      %s39 = int_to_ptr.vmem [resolvable:$true] %s38
      %41 = dma.hbm_to_vmem [thread:$0]  %s2, 128, %s39, [#allocation5]
    $region13: #{tpu_custom_call.1} parent=1 // pred_fallthru
      _
    // Predicated region
    $region14: #{tpu_custom_call.1} parent=1 // pred_check
      _
    $region15: #{tpu_custom_call.1} parent=1 // pred_check_branch
      %43 = sbr.rel (0) target = $region17
    $region16: #{tpu_custom_call.1} parent=1 // pred_region
      %44 = dma.done [#allocation3], 128
    $region17: #{tpu_custom_call.1} parent=1 // pred_fallthru
      _
    // Predicated region
    $region18: #{tpu_custom_call.1} parent=1 // pred_check
      _
    $region19: #{tpu_custom_call.1} parent=1 // pred_check_branch
      %46 = sbr.rel (0) target = $region21
    $region20: #{tpu_custom_call.1} parent=1 // pred_region
      %47 = dma.done [#allocation5], 6144
    $region21: #{tpu_custom_call.1} parent=1 // pred_fallthru
      _
    // Predicated region
    $region22: #{tpu_custom_call.1} parent=1 // pred_check
      _
    $region23: #{tpu_custom_call.1} parent=1 // pred_check_branch
      %49 = sbr.rel (0) target = $region25
    $region24: #{tpu_custom_call.1} parent=1 // pred_region
      %50 = dma.done [#allocation5], 128
    $region25: #{tpu_custom_call.1} parent=1 // pred_fallthru
      _
    %v51 = vld [vmem:[#allocation6] sm:$0x1]
    %v52 = vld [vmem:[#allocation6 + $0x1] sm:$0x1]
    %v53 = vld [vmem:[#allocation6 + $0x2] sm:$0x1]
    %v54 = vld [vmem:[#allocation6 + $0x3] sm:$0x1]
    %v55 = vld [vmem:[#allocation6 + $0x4] sm:$0x1]
    %v56 = vld [vmem:[#allocation6 + $0x5] sm:$0x1]
    %v57 = vld [vmem:[#allocation6 + $0x6] sm:$0x1]
    %v58 = vld [vmem:[#allocation4] sm:$0xff]
    %v59 = vld [vmem:[#allocation4 + $0x8] sm:$0xff]
    %s60 = scalar_lea.vmem [#allocation4], 128
    %v61 = vld [vmem:[%s60] sm:$0xff]
    %v62 = vld [vmem:[%s60 + $0x8] sm:$0xff]
    %v63 = vld [vmem:[%s60 + $0x10] sm:$0xff]
    %v64 = vld [vmem:[%s60 + $0x18] sm:$0xff]
    %v65 = vld [vmem:[%s60 + $0x20] sm:$0xff]
    %v66 = vld [vmem:[%s60 + $0x28] sm:$0xff]
    %v67 = vld [vmem:[%s60 + $0x30] sm:$0xff]
    %v68 = vld [vmem:[%s60 + $0x38] sm:$0xff]
    %v69 = vld [vmem:[%s60 + $0x40] sm:$0xff]
    %v70 = vld [vmem:[%s60 + $0x48] sm:$0xff]
    %v71 = vld [vmem:[%s60 + $0x50] sm:$0xff]
    %v72 = vld [vmem:[%s60 + $0x58] sm:$0xff]
    %v73 = vld [vmem:[%s60 + $0x60] sm:$0xff]
    %v74 = vld [vmem:[%s60 + $0x68] sm:$0xff]
    %v75 = vld [vmem:[%s60 + $0x70] sm:$0xff]
    %v76 = vld [vmem:[%s60 + $0x78] sm:$0xff]
    %s77 = scalar_lea.vmem [#allocation4], 256
    %v78 = vld [vmem:[%s77] sm:$0xff]
    %v79 = vld [vmem:[%s77 + $0x8] sm:$0xff]
    %v80 = vld [vmem:[%s77 + $0x10] sm:$0xff]
    %v81 = vld [vmem:[%s77 + $0x18] sm:$0xff]
    %v82 = vld [vmem:[%s77 + $0x20] sm:$0xff]
    %v83 = vld [vmem:[%s77 + $0x28] sm:$0xff]
    %v84 = vld [vmem:[%s77 + $0x30] sm:$0xff]
    %v85 = vld [vmem:[%s77 + $0x38] sm:$0xff]
    %v86 = vld [vmem:[%s77 + $0x40] sm:$0xff]
    %v87 = vld [vmem:[%s77 + $0x48] sm:$0xff]
    %v88 = vld [vmem:[%s77 + $0x50] sm:$0xff]
    %v89 = vld [vmem:[%s77 + $0x58] sm:$0xff]
    %v90 = vld [vmem:[%s77 + $0x60] sm:$0xff]
    %v91 = vld [vmem:[%s77 + $0x68] sm:$0xff]
    %v92 = vld [vmem:[%s77 + $0x70] sm:$0xff]
    %v93 = vld [vmem:[%s77 + $0x78] sm:$0xff]
    %v94 = vld [vmem:[#allocation2] sm:$0xff]
    %vm95 = vcmask 64512
    %v97 = vsel %vm95, 1.0, 0
    %99 = vmatprep.subr.mxu0 0.0
    %100 = vmatpush1.msra.mxu0 %v94
    %101 = vmatprep.subr.mxu0 0.0
    %102 = vmatpush1.msra.mxu0 0.0
    %103 = vmatprep.subr.mxu0 0.0
    %104 = vmatpush1.msra.mxu0 0.0
    %105 = vmatprep.subr.mxu0 0.0
    %106 = vmatpush1.msra.mxu0 0.0
    %107 = vmatprep.subr.mxu0 0.0
    %108 = vmatpush1.msra.mxu0 0.0
    %109 = vmatprep.subr.mxu0 0.0
    %110 = vmatpush1.msra.mxu0 0.0
    %111 = vmatprep.subr.mxu0 0.0
    %112 = vmatpush1.msra.mxu0 0.0
    %113 = vmatprep.subr.mxu0 0.0
    %114 = vmatpush1.msra.mxu0 0.0
    %115 = vmatprep.subr.mxu0 0.0
    %116 = vmatpush1.msra.mxu0 0.0
    %117 = vmatprep.subr.mxu0 0.0
    %118 = vmatpush1.msra.mxu0 0.0
    %119 = vmatprep.subr.mxu0 0.0
    %120 = vmatpush1.msra.mxu0 0.0
    %121 = vmatprep.subr.mxu0 0.0
    %122 = vmatpush1.msra.mxu0 0.0
    %123 = vmatprep.subr.mxu0 0.0
    %124 = vmatpush1.msra.mxu0 0.0
    %125 = vmatprep.subr.mxu0 0.0
    %126 = vmatpush1.msra.mxu0 0.0
    %127 = vmatprep.subr.mxu0 0.0
    %128 = vmatpush1.msra.mxu0 0.0
    %129 = vmatprep.subr.mxu0 0.0
    %130 = vmatpush1.msra.mxu0 0.0
    %131 = vmatprep.subr.mxu0 0.0
    %132 = vmatpush1.msra.mxu0 0.0
    %133 = vmatprep.subr.mxu0 0.0
    %134 = vmatpush1.msra.mxu0 0.0
    %135 = vmatprep.subr.mxu0 0.0
    %136 = vmatpush1.msra.mxu0 0.0
    %137 = vmatprep.subr.mxu0 0.0
    %138 = vmatpush1.msra.mxu0 0.0
    %139 = vmatprep.subr.mxu0 0.0
    %140 = vmatpush1.msra.mxu0 0.0
    %141 = vmatprep.subr.mxu0 0.0
    %142 = vmatpush1.msra.mxu0 0.0
    %143 = vmatprep.subr.mxu0 0.0
    %144 = vmatpush1.msra.mxu0 0.0
    %145 = vmatprep.subr.mxu0 0.0
    %146 = vmatpush1.msra.mxu0 0.0
    %147 = vmatprep.subr.mxu0 0.0
    %148 = vmatpush1.msra.mxu0 0.0
    %149 = vmatprep.subr.mxu0 0.0
    %150 = vmatpush1.msra.mxu0 0.0
    %151 = vmatprep.subr.mxu0 0.0
    %152 = vmatpush1.msra.mxu0 0.0
    %153 = vmatprep.subr.mxu0 0.0
    %154 = vmatpush1.msra.mxu0 0.0
    %155 = vmatprep.subr.mxu0 0.0
    %156 = vmatpush1.msra.mxu0 0.0
    %157 = vmatprep.subr.mxu0 0.0
    %158 = vmatpush1.msra.mxu0 0.0
    %159 = vmatprep.subr.mxu0 0.0
    %160 = vmatpush1.msra.mxu0 0.0
    %161 = vmatprep.subr.mxu0 0.0
    %162 = vmatpush1.msra.mxu0 0.0
    %163 = vmatprep.mubr.f32.mxu0 0.0
    %164 = vmatmul.mubr.f32.gmra.mrb[0].mxu0 %v97
    %v165 = vpop.f32.mrb[0].mxu0
    %v166 = vadd.f32 0.0, %v165
    %v167 = vpop.f32.mrb[0].mxu0
    %168 = vdwg.mxu0
    %v169 = vmul.f32 %v166, 0.125
    %v170 = vlaneseq
    %v171 = vshrl.u32 %v170, 7
    %v172 = vsub.s32 0, %v171
    %v173 = vrot.slane %v169, %v172
    %v174 = vsub.f32 %v94, %v173
    %v175 = vmul.f32 %v174, %v174
    %176 = vmatprep.subr.mxu0 0.0
    %177 = vmatpush1.msra.mxu0 %v175
    %178 = vmatprep.subr.mxu0 0.0
    %179 = vmatpush1.msra.mxu0 0.0
    %180 = vmatprep.subr.mxu0 0.0
    %181 = vmatpush1.msra.mxu0 0.0
    %182 = vmatprep.subr.mxu0 0.0
    %183 = vmatpush1.msra.mxu0 0.0
    %184 = vmatprep.subr.mxu0 0.0
    %185 = vmatpush1.msra.mxu0 0.0
    %186 = vmatprep.subr.mxu0 0.0
    %187 = vmatpush1.msra.mxu0 0.0
    %188 = vmatprep.subr.mxu0 0.0
    %189 = vmatpush1.msra.mxu0 0.0
    %190 = vmatprep.subr.mxu0 0.0
    %191 = vmatpush1.msra.mxu0 0.0
    %192 = vmatprep.subr.mxu0 0.0
    %193 = vmatpush1.msra.mxu0 0.0
    %194 = vmatprep.subr.mxu0 0.0
    %195 = vmatpush1.msra.mxu0 0.0
    %196 = vmatprep.subr.mxu0 0.0
    %197 = vmatpush1.msra.mxu0 0.0
    %198 = vmatprep.subr.mxu0 0.0
    %199 = vmatpush1.msra.mxu0 0.0
    %200 = vmatprep.subr.mxu0 0.0
    %201 = vmatpush1.msra.mxu0 0.0
    %202 = vmatprep.subr.mxu0 0.0
    %203 = vmatpush1.msra.mxu0 0.0
    %204 = vmatprep.subr.mxu0 0.0
    %205 = vmatpush1.msra.mxu0 0.0
    %206 = vmatprep.subr.mxu0 0.0
    %207 = vmatpush1.msra.mxu0 0.0
    %208 = vmatprep.subr.mxu0 0.0
    %209 = vmatpush1.msra.mxu0 0.0
    %210 = vmatprep.subr.mxu0 0.0
    %211 = vmatpush1.msra.mxu0 0.0
    %212 = vmatprep.subr.mxu0 0.0
    %213 = vmatpush1.msra.mxu0 0.0
    %214 = vmatprep.subr.mxu0 0.0
    %215 = vmatpush1.msra.mxu0 0.0
    %216 = vmatprep.subr.mxu0 0.0
    %217 = vmatpush1.msra.mxu0 0.0
    %218 = vmatprep.subr.mxu0 0.0
    %219 = vmatpush1.msra.mxu0 0.0
    %220 = vmatprep.subr.mxu0 0.0
    %221 = vmatpush1.msra.mxu0 0.0
    %222 = vmatprep.subr.mxu0 0.0
    %223 = vmatpush1.msra.mxu0 0.0
    %224 = vmatprep.subr.mxu0 0.0
    %225 = vmatpush1.msra.mxu0 0.0
    %226 = vmatprep.subr.mxu0 0.0
    %227 = vmatpush1.msra.mxu0 0.0
    %228 = vmatprep.subr.mxu0 0.0
    %229 = vmatpush1.msra.mxu0 0.0
    %230 = vmatprep.subr.mxu0 0.0
    %231 = vmatpush1.msra.mxu0 0.0
    %232 = vmatprep.subr.mxu0 0.0
    %233 = vmatpush1.msra.mxu0 0.0
    %234 = vmatprep.subr.mxu0 0.0
    %235 = vmatpush1.msra.mxu0 0.0
    %236 = vmatprep.subr.mxu0 0.0
    %237 = vmatpush1.msra.mxu0 0.0
    %238 = vmatprep.subr.mxu0 0.0
    %239 = vmatpush1.msra.mxu0 0.0
    %240 = vmatprep.mubr.f32.mxu0 0.0
    %241 = vmatmul.mubr.f32.gmra.mrb[0].mxu0 %v97
    %v242 = vpop.f32.mrb[0].mxu0
    %v243 = vadd.f32 0.0, %v242
    %v244 = vpop.f32.mrb[0].mxu0
    %245 = vdwg.mxu0
    %v246 = vmul.f32 %v243, 0.125
    %v247 = vadd.f32 %v246, 1e-05
    %v248 = vrsqrt.pop %v247
    %v249 = vmul.f32 %v52, %v248
    %v250 = vlaneseq
    %v251 = vshrl.u32 %v250, 7
    %v252 = vsub.s32 0, %v251
    %v253 = vrot.slane %v249, %v252
    %v254 = vmul.f32 %v174, %v253
    %v255 = vlaneseq
    %v256 = vshrl.u32 %v255, 7
    %v257 = vsub.s32 0, %v256
    %v258 = vrot.slane %v53, %v257
    %v259 = vadd.f32 %v254, %v258
    %vm260 = vcmask 130048
    %v262 = vsel %vm260, %v259, 0
    %264 = vmatprep.subr.mxu0 0.0
    %265 = vmatpush1.msra.mxu0 %v58
    %266 = vmatprep.subr.mxu0 0.0
    %267 = vmatpush1.msra.mxu0 %v59
    %268 = vmatprep.subr.mxu0 0.0
    %269 = vmatpush1.msra.mxu0 0.0
    %270 = vmatprep.subr.mxu0 0.0
    %271 = vmatpush1.msra.mxu0 0.0
    %272 = vmatprep.subr.mxu0 0.0
    %273 = vmatpush1.msra.mxu0 0.0
    %274 = vmatprep.subr.mxu0 0.0
    %275 = vmatpush1.msra.mxu0 0.0
    %276 = vmatprep.subr.mxu0 0.0
    %277 = vmatpush1.msra.mxu0 0.0
    %278 = vmatprep.subr.mxu0 0.0
    %279 = vmatpush1.msra.mxu0 0.0
    %280 = vmatprep.subr.mxu0 0.0
    %281 = vmatpush1.msra.mxu0 0.0
    %282 = vmatprep.subr.mxu0 0.0
    %283 = vmatpush1.msra.mxu0 0.0
    %284 = vmatprep.subr.mxu0 0.0
    %285 = vmatpush1.msra.mxu0 0.0
    %286 = vmatprep.subr.mxu0 0.0
    %287 = vmatpush1.msra.mxu0 0.0
    %288 = vmatprep.subr.mxu0 0.0
    %289 = vmatpush1.msra.mxu0 0.0
    %290 = vmatprep.subr.mxu0 0.0
    %291 = vmatpush1.msra.mxu0 0.0
    %292 = vmatprep.subr.mxu0 0.0
    %293 = vmatpush1.msra.mxu0 0.0
    %294 = vmatprep.subr.mxu0 0.0
    %295 = vmatpush1.msra.mxu0 0.0
    %296 = vmatprep.subr.mxu0 0.0
    %297 = vmatpush1.msra.mxu0 0.0
    %298 = vmatprep.subr.mxu0 0.0
    %299 = vmatpush1.msra.mxu0 0.0
    %300 = vmatprep.subr.mxu0 0.0
    %301 = vmatpush1.msra.mxu0 0.0
    %302 = vmatprep.subr.mxu0 0.0
    %303 = vmatpush1.msra.mxu0 0.0
    %304 = vmatprep.subr.mxu0 0.0
    %305 = vmatpush1.msra.mxu0 0.0
    %306 = vmatprep.subr.mxu0 0.0
    %307 = vmatpush1.msra.mxu0 0.0
    %308 = vmatprep.subr.mxu0 0.0
    %309 = vmatpush1.msra.mxu0 0.0
    %310 = vmatprep.subr.mxu0 0.0
    %311 = vmatpush1.msra.mxu0 0.0
    %312 = vmatprep.subr.mxu0 0.0
    %313 = vmatpush1.msra.mxu0 0.0
    %314 = vmatprep.subr.mxu0 0.0
    %315 = vmatpush1.msra.mxu0 0.0
    %316 = vmatprep.subr.mxu0 0.0
    %317 = vmatpush1.msra.mxu0 0.0
    %318 = vmatprep.subr.mxu0 0.0
    %319 = vmatpush1.msra.mxu0 0.0
    %320 = vmatprep.subr.mxu0 0.0
    %321 = vmatpush1.msra.mxu0 0.0
    %322 = vmatprep.subr.mxu0 0.0
    %323 = vmatpush1.msra.mxu0 0.0
    %324 = vmatprep.subr.mxu0 0.0
    %325 = vmatpush1.msra.mxu0 0.0
    %326 = vmatprep.subr.mxu0 0.0
    %327 = vmatpush1.msra.mxu0 0.0
    %328 = vmatprep.mubr.f32.mxu0 0.0
    %329 = vmatmul.mubr.f32.gmra.mrb[0].mxu0 %v262
    %v330 = vpop.f32.mrb[0].mxu0
    %v331 = vadd.f32 0.0, %v330
    %v332 = vpop.f32.mrb[0].mxu0
    %333 = vdwg.mxu0
    %334 = vmatprep.subr.mxu0 0.0
    %335 = vmatpush1.msra.mxu0 %v331
    %336 = vmatprep.subr.mxu0 0.0
    %337 = vmatpush1.msra.mxu0 0.0
    %338 = vmatprep.subr.mxu0 0.0
    %339 = vmatpush1.msra.mxu0 0.0
    %340 = vmatprep.subr.mxu0 0.0
    %341 = vmatpush1.msra.mxu0 0.0
    %342 = vmatprep.subr.mxu0 0.0
    %343 = vmatpush1.msra.mxu0 0.0
    %344 = vmatprep.subr.mxu0 0.0
    %345 = vmatpush1.msra.mxu0 0.0
    %346 = vmatprep.subr.mxu0 0.0
    %347 = vmatpush1.msra.mxu0 0.0
    %348 = vmatprep.subr.mxu0 0.0
    %349 = vmatpush1.msra.mxu0 0.0
    %350 = vmatprep.subr.mxu0 0.0
    %351 = vmatpush1.msra.mxu0 0.0
    %352 = vmatprep.subr.mxu0 0.0
    %353 = vmatpush1.msra.mxu0 0.0
    %354 = vmatprep.subr.mxu0 0.0
    %355 = vmatpush1.msra.mxu0 0.0
    %356 = vmatprep.subr.mxu0 0.0
    %357 = vmatpush1.msra.mxu0 0.0
    %358 = vmatprep.subr.mxu0 0.0
    %359 = vmatpush1.msra.mxu0 0.0
    %360 = vmatprep.subr.mxu0 0.0
    %361 = vmatpush1.msra.mxu0 0.0
    %362 = vmatprep.subr.mxu0 0.0
    %363 = vmatpush1.msra.mxu0 0.0
    %364 = vmatprep.subr.mxu0 0.0
    %365 = vmatpush1.msra.mxu0 0.0
    %366 = vmatprep.subr.mxu0 0.0
    %367 = vmatpush1.msra.mxu0 0.0
    %368 = vmatprep.subr.mxu0 0.0
    %369 = vmatpush1.msra.mxu0 0.0
    %370 = vmatprep.subr.mxu0 0.0
    %371 = vmatpush1.msra.mxu0 0.0
    %372 = vmatprep.subr.mxu0 0.0
    %373 = vmatpush1.msra.mxu0 0.0
    %374 = vmatprep.subr.mxu0 0.0
    %375 = vmatpush1.msra.mxu0 0.0
    %376 = vmatprep.subr.mxu0 0.0
    %377 = vmatpush1.msra.mxu0 0.0
    %378 = vmatprep.subr.mxu0 0.0
    %379 = vmatpush1.msra.mxu0 0.0
    %380 = vmatprep.subr.mxu0 0.0
    %381 = vmatpush1.msra.mxu0 0.0
    %382 = vmatprep.subr.mxu0 0.0
    %383 = vmatpush1.msra.mxu0 0.0
    %384 = vmatprep.subr.mxu0 0.0
    %385 = vmatpush1.msra.mxu0 0.0
    %386 = vmatprep.subr.mxu0 0.0
    %387 = vmatpush1.msra.mxu0 0.0
    %388 = vmatprep.subr.mxu0 0.0
    %389 = vmatpush1.msra.mxu0 0.0
    %390 = vmatprep.subr.mxu0 0.0
    %391 = vmatpush1.msra.mxu0 0.0
    %392 = vmatprep.subr.mxu0 0.0
    %393 = vmatpush1.msra.mxu0 0.0
    %394 = vmatprep.subr.mxu0 0.0
    %395 = vmatpush1.msra.mxu0 0.0
    %396 = vmatprep.subr.mxu0 0.0
    %397 = vmatpush1.msra.mxu0 0.0
    %398 = vmatprep.mubr.f32.mxu0 0.0
    %399 = vmatmul.mubr.f32.gmra.mrb[0].mxu0 %v97
    %v400 = vpop.f32.mrb[0].mxu0
    %v401 = vadd.f32 0.0, %v400
    %v402 = vpop.f32.mrb[0].mxu0
    %403 = vdwg.mxu0
    %v404 = vmul.f32 %v401, 0.125
    %v405 = vlaneseq
    %v406 = vshrl.u32 %v405, 7
    %v407 = vsub.s32 0, %v406
    %v408 = vrot.slane %v404, %v407
    %v409 = vsub.f32 %v331, %v408
    %v410 = vmul.f32 %v409, %v409
    %411 = vmatprep.subr.mxu0 0.0
    %412 = vmatpush1.msra.mxu0 %v410
    %413 = vmatprep.subr.mxu0 0.0
    %414 = vmatpush1.msra.mxu0 0.0
    %415 = vmatprep.subr.mxu0 0.0
    %416 = vmatpush1.msra.mxu0 0.0
    %417 = vmatprep.subr.mxu0 0.0
    %418 = vmatpush1.msra.mxu0 0.0
    %419 = vmatprep.subr.mxu0 0.0
    %420 = vmatpush1.msra.mxu0 0.0
    %421 = vmatprep.subr.mxu0 0.0
    %422 = vmatpush1.msra.mxu0 0.0
    %423 = vmatprep.subr.mxu0 0.0
    %424 = vmatpush1.msra.mxu0 0.0
    %425 = vmatprep.subr.mxu0 0.0
    %426 = vmatpush1.msra.mxu0 0.0
    %427 = vmatprep.subr.mxu0 0.0
    %428 = vmatpush1.msra.mxu0 0.0
    %429 = vmatprep.subr.mxu0 0.0
    %430 = vmatpush1.msra.mxu0 0.0
    %431 = vmatprep.subr.mxu0 0.0
    %432 = vmatpush1.msra.mxu0 0.0
    %433 = vmatprep.subr.mxu0 0.0
    %434 = vmatpush1.msra.mxu0 0.0
    %435 = vmatprep.subr.mxu0 0.0
    %436 = vmatpush1.msra.mxu0 0.0
    %437 = vmatprep.subr.mxu0 0.0
    %438 = vmatpush1.msra.mxu0 0.0
    %439 = vmatprep.subr.mxu0 0.0
    %440 = vmatpush1.msra.mxu0 0.0
    %441 = vmatprep.subr.mxu0 0.0
    %442 = vmatpush1.msra.mxu0 0.0
    %443 = vmatprep.subr.mxu0 0.0
    %444 = vmatpush1.msra.mxu0 0.0
    %445 = vmatprep.subr.mxu0 0.0
    %446 = vmatpush1.msra.mxu0 0.0
    %447 = vmatprep.subr.mxu0 0.0
    %448 = vmatpush1.msra.mxu0 0.0
    %449 = vmatprep.subr.mxu0 0.0
    %450 = vmatpush1.msra.mxu0 0.0
    %451 = vmatprep.subr.mxu0 0.0
    %452 = vmatpush1.msra.mxu0 0.0
    %453 = vmatprep.subr.mxu0 0.0
    %454 = vmatpush1.msra.mxu0 0.0
    %455 = vmatprep.subr.mxu0 0.0
    %456 = vmatpush1.msra.mxu0 0.0
    %457 = vmatprep.subr.mxu0 0.0
    %458 = vmatpush1.msra.mxu0 0.0
    %459 = vmatprep.subr.mxu0 0.0
    %460 = vmatpush1.msra.mxu0 0.0
    %461 = vmatprep.subr.mxu0 0.0
    %462 = vmatpush1.msra.mxu0 0.0
    %463 = vmatprep.subr.mxu0 0.0
    %464 = vmatpush1.msra.mxu0 0.0
    %465 = vmatprep.subr.mxu0 0.0
    %466 = vmatpush1.msra.mxu0 0.0
    %467 = vmatprep.subr.mxu0 0.0
    %468 = vmatpush1.msra.mxu0 0.0
    %469 = vmatprep.subr.mxu0 0.0
    %470 = vmatpush1.msra.mxu0 0.0
    %471 = vmatprep.subr.mxu0 0.0
    %472 = vmatpush1.msra.mxu0 0.0
    %473 = vmatprep.subr.mxu0 0.0
    %474 = vmatpush1.msra.mxu0 0.0
    %475 = vmatprep.mubr.f32.mxu0 0.0
    %476 = vmatmul.mubr.f32.gmra.mrb[0].mxu0 %v97
    %v477 = vpop.f32.mrb[0].mxu0
    %v478 = vadd.f32 0.0, %v477
    %v479 = vpop.f32.mrb[0].mxu0
    %480 = vdwg.mxu0
    %v481 = vmul.f32 %v478, 0.125
    %v482 = vadd.f32 %v481, 1e-05
    %v483 = vrsqrt.pop %v482
    %v484 = vmul.f32 %v54, %v483
    %v485 = vlaneseq
    %v486 = vshrl.u32 %v485, 7
    %v487 = vsub.s32 0, %v486
    %v488 = vrot.slane %v484, %v487
    %v489 = vmul.f32 %v409, %v488
    %v490 = vlaneseq
    %v491 = vshrl.u32 %v490, 7
    %v492 = vsub.s32 0, %v491
    %v493 = vrot.slane %v55, %v492
    %v494 = vadd.f32 %v489, %v493
    %v495 = vmax.f32 %v494, 0.0
    %496 = vmatprep.subr.mxu0 0.0
    %497 = vmatpush1.msra.mxu0 %v61
    %498 = vmatprep.subr.mxu0 0.0
    %499 = vmatpush1.msra.mxu0 %v62
    %500 = vmatprep.subr.mxu0 0.0
    %501 = vmatpush1.msra.mxu0 %v63
    %502 = vmatprep.subr.mxu0 0.0
    %503 = vmatpush1.msra.mxu0 %v64
    %504 = vmatprep.subr.mxu0 0.0
    %505 = vmatpush1.msra.mxu0 %v65
    %506 = vmatprep.subr.mxu0 0.0
    %507 = vmatpush1.msra.mxu0 %v66
    %508 = vmatprep.subr.mxu0 0.0
    %509 = vmatpush1.msra.mxu0 %v67
    %510 = vmatprep.subr.mxu0 0.0
    %511 = vmatpush1.msra.mxu0 %v68
    %512 = vmatprep.subr.mxu0 0.0
    %513 = vmatpush1.msra.mxu0 %v69
    %514 = vmatprep.subr.mxu0 0.0
    %515 = vmatpush1.msra.mxu0 %v70
    %516 = vmatprep.subr.mxu0 0.0
    %517 = vmatpush1.msra.mxu0 %v71
    %518 = vmatprep.subr.mxu0 0.0
    %519 = vmatpush1.msra.mxu0 %v72
    %520 = vmatprep.subr.mxu0 0.0
    %521 = vmatpush1.msra.mxu0 %v73
    %522 = vmatprep.subr.mxu0 0.0
    %523 = vmatpush1.msra.mxu0 %v74
    %524 = vmatprep.subr.mxu0 0.0
    %525 = vmatpush1.msra.mxu0 %v75
    %526 = vmatprep.subr.mxu0 0.0
    %527 = vmatpush1.msra.mxu0 %v76
    %528 = vmatprep.subr.mxu0 0.0
    %529 = vmatpush1.msra.mxu0 0.0
    %530 = vmatprep.subr.mxu0 0.0
    %531 = vmatpush1.msra.mxu0 0.0
    %532 = vmatprep.subr.mxu0 0.0
    %533 = vmatpush1.msra.mxu0 0.0
    %534 = vmatprep.subr.mxu0 0.0
    %535 = vmatpush1.msra.mxu0 0.0
    %536 = vmatprep.subr.mxu0 0.0
    %537 = vmatpush1.msra.mxu0 0.0
    %538 = vmatprep.subr.mxu0 0.0
    %539 = vmatpush1.msra.mxu0 0.0
    %540 = vmatprep.subr.mxu0 0.0
    %541 = vmatpush1.msra.mxu0 0.0
    %542 = vmatprep.subr.mxu0 0.0
    %543 = vmatpush1.msra.mxu0 0.0
    %544 = vmatprep.subr.mxu0 0.0
    %545 = vmatpush1.msra.mxu0 0.0
    %546 = vmatprep.subr.mxu0 0.0
    %547 = vmatpush1.msra.mxu0 0.0
    %548 = vmatprep.subr.mxu0 0.0
    %549 = vmatpush1.msra.mxu0 0.0
    %550 = vmatprep.subr.mxu0 0.0
    %551 = vmatpush1.msra.mxu0 0.0
    %552 = vmatprep.subr.mxu0 0.0
    %553 = vmatpush1.msra.mxu0 0.0
    %554 = vmatprep.subr.mxu0 0.0
    %555 = vmatpush1.msra.mxu0 0.0
    %556 = vmatprep.subr.mxu0 0.0
    %557 = vmatpush1.msra.mxu0 0.0
    %558 = vmatprep.subr.mxu0 0.0
    %559 = vmatpush1.msra.mxu0 0.0
    %560 = vmatprep.mubr.f32.mxu0 0.0
    %561 = vmatmul.mubr.f32.gmra.mrb[0].mxu0 %v495
    %v562 = vpop.f32.mrb[0].mxu0
    %v563 = vadd.f32 0.0, %v562
    %v564 = vpop.f32.mrb[0].mxu0
    %565 = vdwg.mxu0
    %566 = vmatprep.subr.mxu0 0.0
    %567 = vmatpush1.msra.mxu0 %v563
    %568 = vmatprep.subr.mxu0 0.0
    %569 = vmatpush1.msra.mxu0 0.0
    %570 = vmatprep.subr.mxu0 0.0
    %571 = vmatpush1.msra.mxu0 0.0
    %572 = vmatprep.subr.mxu0 0.0
    %573 = vmatpush1.msra.mxu0 0.0
    %574 = vmatprep.subr.mxu0 0.0
    %575 = vmatpush1.msra.mxu0 0.0
    %576 = vmatprep.subr.mxu0 0.0
    %577 = vmatpush1.msra.mxu0 0.0
    %578 = vmatprep.subr.mxu0 0.0
    %579 = vmatpush1.msra.mxu0 0.0
    %580 = vmatprep.subr.mxu0 0.0
    %581 = vmatpush1.msra.mxu0 0.0
    %582 = vmatprep.subr.mxu0 0.0
    %583 = vmatpush1.msra.mxu0 0.0
    %584 = vmatprep.subr.mxu0 0.0
    %585 = vmatpush1.msra.mxu0 0.0
    %586 = vmatprep.subr.mxu0 0.0
    %587 = vmatpush1.msra.mxu0 0.0
    %588 = vmatprep.subr.mxu0 0.0
    %589 = vmatpush1.msra.mxu0 0.0
    %590 = vmatprep.subr.mxu0 0.0
    %591 = vmatpush1.msra.mxu0 0.0
    %592 = vmatprep.subr.mxu0 0.0
    %593 = vmatpush1.msra.mxu0 0.0
    %594 = vmatprep.subr.mxu0 0.0
    %595 = vmatpush1.msra.mxu0 0.0
    %596 = vmatprep.subr.mxu0 0.0
    %597 = vmatpush1.msra.mxu0 0.0
    %598 = vmatprep.subr.mxu0 0.0
    %599 = vmatpush1.msra.mxu0 0.0
    %600 = vmatprep.subr.mxu0 0.0
    %601 = vmatpush1.msra.mxu0 0.0
    %602 = vmatprep.subr.mxu0 0.0
    %603 = vmatpush1.msra.mxu0 0.0
    %604 = vmatprep.subr.mxu0 0.0
    %605 = vmatpush1.msra.mxu0 0.0
    %606 = vmatprep.subr.mxu0 0.0
    %607 = vmatpush1.msra.mxu0 0.0
    %608 = vmatprep.subr.mxu0 0.0
    %609 = vmatpush1.msra.mxu0 0.0
    %610 = vmatprep.subr.mxu0 0.0
    %611 = vmatpush1.msra.mxu0 0.0
    %612 = vmatprep.subr.mxu0 0.0
    %613 = vmatpush1.msra.mxu0 0.0
    %614 = vmatprep.subr.mxu0 0.0
    %615 = vmatpush1.msra.mxu0 0.0
    %616 = vmatprep.subr.mxu0 0.0
    %617 = vmatpush1.msra.mxu0 0.0
    %618 = vmatprep.subr.mxu0 0.0
    %619 = vmatpush1.msra.mxu0 0.0
    %620 = vmatprep.subr.mxu0 0.0
    %621 = vmatpush1.msra.mxu0 0.0
    %622 = vmatprep.subr.mxu0 0.0
    %623 = vmatpush1.msra.mxu0 0.0
    %624 = vmatprep.subr.mxu0 0.0
    %625 = vmatpush1.msra.mxu0 0.0
    %626 = vmatprep.subr.mxu0 0.0
    %627 = vmatpush1.msra.mxu0 0.0
    %628 = vmatprep.subr.mxu0 0.0
    %629 = vmatpush1.msra.mxu0 0.0
    %630 = vmatprep.mubr.f32.mxu0 0.0
    %631 = vmatmul.mubr.f32.gmra.mrb[0].mxu0 %v97
    %v632 = vpop.f32.mrb[0].mxu0
    %v633 = vadd.f32 0.0, %v632
    %v634 = vpop.f32.mrb[0].mxu0
    %635 = vdwg.mxu0
    %v636 = vmul.f32 %v633, 0.125
    %v637 = vlaneseq
    %v638 = vshrl.u32 %v637, 7
    %v639 = vsub.s32 0, %v638
    %v640 = vrot.slane %v636, %v639
    %v641 = vsub.f32 %v563, %v640
    %v642 = vmul.f32 %v641, %v641
    %643 = vmatprep.subr.mxu0 0.0
    %644 = vmatpush1.msra.mxu0 %v642
    %645 = vmatprep.subr.mxu0 0.0
    %646 = vmatpush1.msra.mxu0 0.0
    %647 = vmatprep.subr.mxu0 0.0
    %648 = vmatpush1.msra.mxu0 0.0
    %649 = vmatprep.subr.mxu0 0.0
    %650 = vmatpush1.msra.mxu0 0.0
    %651 = vmatprep.subr.mxu0 0.0
    %652 = vmatpush1.msra.mxu0 0.0
    %653 = vmatprep.subr.mxu0 0.0
    %654 = vmatpush1.msra.mxu0 0.0
    %655 = vmatprep.subr.mxu0 0.0
    %656 = vmatpush1.msra.mxu0 0.0
    %657 = vmatprep.subr.mxu0 0.0
    %658 = vmatpush1.msra.mxu0 0.0
    %659 = vmatprep.subr.mxu0 0.0
    %660 = vmatpush1.msra.mxu0 0.0
    %661 = vmatprep.subr.mxu0 0.0
    %662 = vmatpush1.msra.mxu0 0.0
    %663 = vmatprep.subr.mxu0 0.0
    %664 = vmatpush1.msra.mxu0 0.0
    %665 = vmatprep.subr.mxu0 0.0
    %666 = vmatpush1.msra.mxu0 0.0
    %667 = vmatprep.subr.mxu0 0.0
    %668 = vmatpush1.msra.mxu0 0.0
    %669 = vmatprep.subr.mxu0 0.0
    %670 = vmatpush1.msra.mxu0 0.0
    %671 = vmatprep.subr.mxu0 0.0
    %672 = vmatpush1.msra.mxu0 0.0
    %673 = vmatprep.subr.mxu0 0.0
    %674 = vmatpush1.msra.mxu0 0.0
    %675 = vmatprep.subr.mxu0 0.0
    %676 = vmatpush1.msra.mxu0 0.0
    %677 = vmatprep.subr.mxu0 0.0
    %678 = vmatpush1.msra.mxu0 0.0
    %679 = vmatprep.subr.mxu0 0.0
    %680 = vmatpush1.msra.mxu0 0.0
    %681 = vmatprep.subr.mxu0 0.0
    %682 = vmatpush1.msra.mxu0 0.0
    %683 = vmatprep.subr.mxu0 0.0
    %684 = vmatpush1.msra.mxu0 0.0
    %685 = vmatprep.subr.mxu0 0.0
    %686 = vmatpush1.msra.mxu0 0.0
    %687 = vmatprep.subr.mxu0 0.0
    %688 = vmatpush1.msra.mxu0 0.0
    %689 = vmatprep.subr.mxu0 0.0
    %690 = vmatpush1.msra.mxu0 0.0
    %691 = vmatprep.subr.mxu0 0.0
    %692 = vmatpush1.msra.mxu0 0.0
    %693 = vmatprep.subr.mxu0 0.0
    %694 = vmatpush1.msra.mxu0 0.0
    %695 = vmatprep.subr.mxu0 0.0
    %696 = vmatpush1.msra.mxu0 0.0
    %697 = vmatprep.subr.mxu0 0.0
    %698 = vmatpush1.msra.mxu0 0.0
    %699 = vmatprep.subr.mxu0 0.0
    %700 = vmatpush1.msra.mxu0 0.0
    %701 = vmatprep.subr.mxu0 0.0
    %702 = vmatpush1.msra.mxu0 0.0
    %703 = vmatprep.subr.mxu0 0.0
    %704 = vmatpush1.msra.mxu0 0.0
    %705 = vmatprep.subr.mxu0 0.0
    %706 = vmatpush1.msra.mxu0 0.0
    %707 = vmatprep.mubr.f32.mxu0 0.0
    %708 = vmatmul.mubr.f32.gmra.mrb[0].mxu0 %v97
    %v709 = vpop.f32.mrb[0].mxu0
    %v710 = vadd.f32 0.0, %v709
    %v711 = vpop.f32.mrb[0].mxu0
    %712 = vdwg.mxu0
    %v713 = vmul.f32 %v710, 0.125
    %v714 = vadd.f32 %v713, 1e-05
    %v715 = vrsqrt.pop %v714
    %v716 = vmul.f32 %v56, %v715
    %v717 = vlaneseq
    %v718 = vshrl.u32 %v717, 7
    %v719 = vsub.s32 0, %v718
    %v720 = vrot.slane %v716, %v719
    %v721 = vmul.f32 %v641, %v720
    %v722 = vlaneseq
    %v723 = vshrl.u32 %v722, 7
    %v724 = vsub.s32 0, %v723
    %v725 = vrot.slane %v57, %v724
    %v726 = vadd.f32 %v721, %v725
    %v727 = vmax.f32 %v726, 0.0
    %728 = vmatprep.subr.mxu0 0.0
    %729 = vmatpush1.msra.mxu0 %v78
    %730 = vmatprep.subr.mxu0 0.0
    %731 = vmatpush1.msra.mxu0 %v79
    %732 = vmatprep.subr.mxu0 0.0
    %733 = vmatpush1.msra.mxu0 %v80
    %734 = vmatprep.subr.mxu0 0.0
    %735 = vmatpush1.msra.mxu0 %v81
    %736 = vmatprep.subr.mxu0 0.0
    %737 = vmatpush1.msra.mxu0 %v82
    %738 = vmatprep.subr.mxu0 0.0
    %739 = vmatpush1.msra.mxu0 %v83
    %740 = vmatprep.subr.mxu0 0.0
    %741 = vmatpush1.msra.mxu0 %v84
    %742 = vmatprep.subr.mxu0 0.0
    %743 = vmatpush1.msra.mxu0 %v85
    %744 = vmatprep.subr.mxu0 0.0
    %745 = vmatpush1.msra.mxu0 %v86
    %746 = vmatprep.subr.mxu0 0.0
    %747 = vmatpush1.msra.mxu0 %v87
    %748 = vmatprep.subr.mxu0 0.0
    %749 = vmatpush1.msra.mxu0 %v88
    %750 = vmatprep.subr.mxu0 0.0
    %751 = vmatpush1.msra.mxu0 %v89
    %752 = vmatprep.subr.mxu0 0.0
    %753 = vmatpush1.msra.mxu0 %v90
    %754 = vmatprep.subr.mxu0 0.0
    %755 = vmatpush1.msra.mxu0 %v91
    %756 = vmatprep.subr.mxu0 0.0
    %757 = vmatpush1.msra.mxu0 %v92
    %758 = vmatprep.subr.mxu0 0.0
    %759 = vmatpush1.msra.mxu0 %v93
    %760 = vmatprep.subr.mxu0 0.0
    %761 = vmatpush1.msra.mxu0 0.0
    %762 = vmatprep.subr.mxu0 0.0
    %763 = vmatpush1.msra.mxu0 0.0
    %764 = vmatprep.subr.mxu0 0.0
    %765 = vmatpush1.msra.mxu0 0.0
    %766 = vmatprep.subr.mxu0 0.0
    %767 = vmatpush1.msra.mxu0 0.0
    %768 = vmatprep.subr.mxu0 0.0
    %769 = vmatpush1.msra.mxu0 0.0
    %770 = vmatprep.subr.mxu0 0.0
    %771 = vmatpush1.msra.mxu0 0.0
    %772 = vmatprep.subr.mxu0 0.0
    %773 = vmatpush1.msra.mxu0 0.0
    %774 = vmatprep.subr.mxu0 0.0
    %775 = vmatpush1.msra.mxu0 0.0
    %776 = vmatprep.subr.mxu0 0.0
    %777 = vmatpush1.msra.mxu0 0.0
    %778 = vmatprep.subr.mxu0 0.0
    %779 = vmatpush1.msra.mxu0 0.0
    %780 = vmatprep.subr.mxu0 0.0
    %781 = vmatpush1.msra.mxu0 0.0
    %782 = vmatprep.subr.mxu0 0.0
    %783 = vmatpush1.msra.mxu0 0.0
    %784 = vmatprep.subr.mxu0 0.0
    %785 = vmatpush1.msra.mxu0 0.0
    %786 = vmatprep.subr.mxu0 0.0
    %787 = vmatpush1.msra.mxu0 0.0
    %788 = vmatprep.subr.mxu0 0.0
    %789 = vmatpush1.msra.mxu0 0.0
    %790 = vmatprep.subr.mxu0 0.0
    %791 = vmatpush1.msra.mxu0 0.0
    %792 = vmatprep.mubr.f32.mxu0 0.0
    %793 = vmatmul.mubr.f32.gmra.mrb[0].mxu0 %v727
    %v794 = vpop.f32.mrb[0].mxu0
    %v795 = vadd.f32 0.0, %v794
    %v796 = vpop.f32.mrb[0].mxu0
    %797 = vdwg.mxu0
    %v798 = vlaneseq
    %v799 = vshrl.u32 %v798, 7
    %v800 = vsub.s32 0, %v799
    %v801 = vrot.slane %v51, %v800
    %v802 = vadd.f32 %v795, %v801
    %v803 = vtanh.pop %v802
    %vm804 = vcmask 31744
    %805 = vst.msk [vmem:[%s3] sm:$0xff] %vm804, %v803
    // Predicated region
    $region26: #{tpu_custom_call.1} parent=1 // pred_check
      _
    $region27: #{tpu_custom_call.1} parent=1 // pred_check_branch
      %807 = sbr.rel (0) target = $region29
    $region28: #{tpu_custom_call.1} parent=1 // pred_region
      _
    $region29: #{tpu_custom_call.1} parent=1 // pred_fallthru
      _
    // Predicated region
    $region30: #{tpu_custom_call.1} parent=1 // pred_check
      _
    $region31: #{tpu_custom_call.1} parent=1 // pred_check_branch
      %809 = sbr.rel (0) target = $region33
    $region32: #{tpu_custom_call.1} parent=1 // pred_region
      _
    $region33: #{tpu_custom_call.1} parent=1 // pred_fallthru
      _
    %810 = vsyncpa [#allocation3], 1
    %811 = vsyncpa [#allocation5], 1

</llo_original>
